<compile_context>
chip_gen: v5e
topology: v5e:2x2
jax: 0.10.0
libtpu: 0.0.40
codegen_flags: <defaults>
</compile_context>

<pallas_src>
import jax
import jax.numpy as jnp
from jax import lax
from jax.experimental import pallas as pl
from jax.experimental.pallas import tpu as pltpu

LANE = 128
SUBLANE = 8
N_ACTIONS = 3
HEAD_PAD = 128   # fused-head width: [0:3] action logits | [3] bet | [4] value | zero pad
TB_MAX = 512     # max batch-tile rows


def _round_up(x, m):
    return ((x + m - 1) // m) * m


def gto_poker_kernel(
    x_ref,
    w1_ref, b1_ref,
    w2_ref, b2_ref,
    w3_ref, b3_ref,
    w4_ref, b4_ref,
    wh_ref, bh_ref,
    out_ref,
    xs_ref,
):
    f_in = x_ref.shape[1]      # 611 (raw feature dim)
    f_pad = xs_ref.shape[1]    # 640 (lane-aligned)
    tb = xs_ref.shape[0]

    # In-kernel cast (f32 -> bf16) + zero-pad (f_in -> f_pad) of the streaming input.
    if f_in == f_pad:
        xs_ref[...] = x_ref[...].astype(jnp.bfloat16)
    else:
        # Order matters: zero the last lane-tile first; the real data store then
        # overwrites [.., f_in), leaving [f_in, f_pad) = 0 every grid step.
        xs_ref[:, f_pad - LANE:] = jnp.zeros((tb, LANE), jnp.bfloat16)
        xs_ref[:, :f_in] = x_ref[...].astype(jnp.bfloat16)

    # shared trunk: 4 x (Linear -> ReLU); Dropout = identity in eval.
    # bf16 operands into the MXU, f32 accumulation, f32 bias add.
    h = jnp.dot(xs_ref[...], w1_ref[...], preferred_element_type=jnp.float32) + b1_ref[...]
    h = jnp.maximum(h, 0.0).astype(jnp.bfloat16)
    h = jnp.dot(h, w2_ref[...], preferred_element_type=jnp.float32) + b2_ref[...]
    h = jnp.maximum(h, 0.0).astype(jnp.bfloat16)
    h = jnp.dot(h, w3_ref[...], preferred_element_type=jnp.float32) + b3_ref[...]
    h = jnp.maximum(h, 0.0).astype(jnp.bfloat16)
    h = jnp.dot(h, w4_ref[...], preferred_element_type=jnp.float32) + b4_ref[...]
    h = jnp.maximum(h, 0.0).astype(jnp.bfloat16)

    # fused heads: one (128, HEAD_PAD) matmul.
    logits = jnp.dot(h, wh_ref[...], preferred_element_type=jnp.float32) + bh_ref[...]
    col = lax.broadcasted_iota(jnp.int32, logits.shape, 1)
    is_act = col < N_ACTIONS
    is_bet = col == N_ACTIONS
    NEG = jnp.float32(-1e30)

    # masked row-max over the 3 action columns
    act_logits = jnp.where(is_act, logits, NEG)
    m = jnp.max(act_logits, axis=-1, keepdims=True)

    # Single fused exp pass:
    #   cols 0..2 : exp(action_logit - m)   (softmax numerators)
    #   col  3    : exp(-bet_logit)         (for sigmoid)
    #   others    : exp(-1e30) = 0
    z = jnp.where(is_act, logits - m, jnp.where(is_bet, -logits, NEG))
    e = jnp.exp(z)

    denom = jnp.sum(jnp.where(is_act, e, 0.0), axis=-1, keepdims=True)
    probs = e * (1.0 / denom)                       # exact divide on a (tb,1) column
    e_bet = jnp.sum(jnp.where(is_bet, e, 0.0), axis=-1, keepdims=True)
    sig = pl.reciprocal(1.0 + e_bet, approx=True)   # sigmoid(x) = 1/(1+exp(-x))

    out = jnp.where(is_act, probs, jnp.where(is_bet, sig, logits))
    out_ref[...] = out.astype(out_ref.dtype)        # single unmasked 128-lane bf16 store


def prepare_params(params, input_size):
    """Pad / fuse / cast the f32 (in, out)-layout params into kernel form."""
    f_pad = _round_up(input_size, LANE)

    # layer 1: input_size -> 256, rows padded to f_pad
    w1 = jnp.zeros((f_pad, 256), jnp.float32).at[:input_size].set(params["w1"])

    # layer 3: 128 -> 64, output lanes padded to 128 (lane-dense activations)
    w3 = jnp.zeros((128, 128), jnp.float32).at[:, :64].set(params["w3"])
    b3 = jnp.zeros((1, 128), jnp.float32).at[:, :64].set(params["b3"])
    # layer 4: 64 -> 32, padded to (128, 128)
    w4 = jnp.zeros((128, 128), jnp.float32).at[:64, :32].set(params["w4"])
    b4 = jnp.zeros((1, 128), jnp.float32).at[:, :32].set(params["b4"])

    # fused heads: (128, HEAD_PAD); rows 32.. and pad columns are zero
    wh = jnp.zeros((128, HEAD_PAD), jnp.float32)
    wh = wh.at[:32, 0:N_ACTIONS].set(params["wa"])
    wh = wh.at[:32, N_ACTIONS:N_ACTIONS + 1].set(params["wb"])
    wh = wh.at[:32, N_ACTIONS + 1:N_ACTIONS + 2].set(params["wv"])

    bh = jnp.zeros((1, HEAD_PAD), jnp.float32)
    bh = bh.at[:, 0:N_ACTIONS].set(params["ba"])
    bh = bh.at[:, N_ACTIONS:N_ACTIONS + 1].set(params["bb"])
    bh = bh.at[:, N_ACTIONS + 1:N_ACTIONS + 2].set(params["bv"])

    return {
        "w1": w1.astype(jnp.bfloat16), "b1": params["b1"],
        "w2": params["w2"].astype(jnp.bfloat16), "b2": params["b2"],
        "w3": w3.astype(jnp.bfloat16), "b3": b3,
        "w4": w4.astype(jnp.bfloat16), "b4": b4,
        "wh": wh.astype(jnp.bfloat16), "bh": bh,
    }


def gto_poker_net(x, kp):
    """x: (B, input_size) float32 (raw, unpadded). kp: output of prepare_params."""
    B, F = x.shape
    f_pad = kp["w1"].shape[0]

    # Batch tile: single block for small/medium batches (latency path); for large
    # batches up to 512 rows, capped so grid >= 2 (v7x: 2 TCs shard the parallel axis).
    if B <= 256:
        tb = B                                        # block dim == full array dim: legal
    else:
        tb = min(TB_MAX, _round_up(pl.cdiv(B, 2), LANE))
    grid = pl.cdiv(B, tb)                             # boundary blocks are clipped by Pallas

    args = (
        x,
        kp["w1"], kp["b1"],
        kp["w2"], kp["b2"],
        kp["w3"], kp["b3"],
        kp["w4"], kp["b4"],
        kp["wh"], kp["bh"],
    )

    const_map = lambda i: (0, 0)                      # weights/biases: resident, DMA'd once
    in_specs = [pl.BlockSpec((tb, F), lambda i: (i, 0))]   # raw f32 x, full feature dim
    in_specs += [pl.BlockSpec(a.shape, const_map) for a in args[1:]]

    weight_bytes = sum(int(a.size) * a.dtype.itemsize for a in args[1:])
    cost = pl.CostEstimate(
        flops=2 * B * (f_pad * 256 + 256 * 128 + 128 * 128 + 128 * 128 + 128 * HEAD_PAD),
        transcendentals=B * HEAD_PAD,                 # one fused exp pass per row
        bytes_accessed=B * F * 4 + B * HEAD_PAD * 2 + weight_bytes,
    )

    out = pl.pallas_call(
        gto_poker_kernel,
        out_shape=jax.ShapeDtypeStruct((B, HEAD_PAD), jnp.bfloat16),
        grid=(grid,),
        in_specs=in_specs,
        out_specs=pl.BlockSpec((tb, HEAD_PAD), lambda i: (i, 0)),
        scratch_shapes=[pltpu.VMEM((tb, f_pad), jnp.bfloat16)],   # padded bf16 x tile
        compiler_params=pltpu.CompilerParams(dimension_semantics=("parallel",)),
        cost_estimate=cost,
    )(*args)

    out = out.astype(jnp.float32)
    return {
        "action_probs": out[:, 0:N_ACTIONS],
        "bet_sizing": out[:, N_ACTIONS:N_ACTIONS + 1],
        "state_values": out[:, N_ACTIONS + 1:N_ACTIONS + 2],
    }


def gto_poker_ref(x, kp):
    """Pure-JAX reference with the same bf16 casting scheme (for validation)."""
    B, F = x.shape
    f_pad = kp["w1"].shape[0]
    h = jnp.zeros((B, f_pad), jnp.float32).at[:, :F].set(x)

    def layer(h, w, b):
        y = jnp.dot(h.astype(jnp.bfloat16), w, preferred_element_type=jnp.float32) + b
        return jnp.maximum(y, 0.0)

    h = layer(h, kp["w1"], kp["b1"])
    h = layer(h, kp["w2"], kp["b2"])
    h = layer(h, kp["w3"], kp["b3"])
    h = layer(h, kp["w4"], kp["b4"])
    logits = jnp.dot(h.astype(jnp.bfloat16), kp["wh"],
                     preferred_element_type=jnp.float32) + kp["bh"]
    return {
        "action_probs": jax.nn.softmax(logits[:, :N_ACTIONS], axis=-1),
        "bet_sizing": jax.nn.sigmoid(logits[:, N_ACTIONS:N_ACTIONS + 1]),
        "state_values": logits[:, N_ACTIONS + 1:N_ACTIONS + 2],
    }


def _linear_params(key, fan_in, fan_out):
    """Mimic torch.nn.Linear default init; weights stored as (in, out)."""
    kw, kb = jax.random.split(key)
    bound = 1.0 / jnp.sqrt(float(fan_in))
    w = jax.random.uniform(kw, (fan_in, fan_out), jnp.float32, -bound, bound)
    b = jax.random.uniform(kb, (1, fan_out), jnp.float32, -bound, bound)
    return w, b


def init_params(key, input_size=611):
    keys = jax.random.split(key, 8)
    p = {}
    p["w1"], p["b1"] = _linear_params(keys[0], input_size, 256)
    p["w2"], p["b2"] = _linear_params(keys[1], 256, 128)
    p["w3"], p["b3"] = _linear_params(keys[2], 128, 64)
    p["w4"], p["b4"] = _linear_params(keys[3], 64, 32)
    p["wa"], p["ba"] = _linear_params(keys[4], 32, 3)
    # bet_sizing head: weight ~ N(0, 0.1), bias = 0.4
    p["wb"] = 0.1 * jax.random.normal(keys[5], (32, 1), jnp.float32)
    p["bb"] = jnp.full((1, 1), 0.4, jnp.float32)
    # value head: weight ~ N(0, 0.1), bias = 0.0
    p["wv"] = 0.1 * jax.random.normal(keys[6], (32, 1), jnp.float32)
    p["bv"] = jnp.zeros((1, 1), jnp.float32)
    return p


if __name__ == "__main__":
    key = jax.random.PRNGKey(0)
    k_x, k_p = jax.random.split(key)

    input_size = 611
    batch = 8
    x = jax.random.normal(k_x, (batch, input_size), jnp.float32)
    params = init_params(k_p, input_size)
    kparams = prepare_params(params, input_size)

    out = gto_poker_net(x, kparams)
    jax.block_until_ready(out)

    ref = gto_poker_ref(x, kparams)

    # sanity: shapes, softmax rows ~ sum to 1, sigmoid in (0,1), matches reference
    assert out["action_probs"].shape == (batch, 3)
    assert out["bet_sizing"].shape == (batch, 1)
    assert out["state_values"].shape == (batch, 1)
    assert jnp.allclose(out["action_probs"].sum(-1), 1.0, atol=1e-2)
    assert bool(jnp.all((out["bet_sizing"] > 0.0) & (out["bet_sizing"] < 1.0)))
    for k in out:
        assert jnp.allclose(out[k], ref[k], atol=2e-2), k

    print("KERNEL_OK")
</pallas_src>

<mosaic_0001>
module attributes {stable_mosaic.version = 11 : i64} {
  func.func @gto_poker_kernel(%arg0: i32, %arg1: memref<8x611xf32, #tpu.memory_space<vmem>>, %arg2: memref<640x256xbf16, #tpu.memory_space<vmem>>, %arg3: memref<1x256xf32, #tpu.memory_space<vmem>>, %arg4: memref<256x128xbf16, #tpu.memory_space<vmem>>, %arg5: memref<1x128xf32, #tpu.memory_space<vmem>>, %arg6: memref<128x128xbf16, #tpu.memory_space<vmem>>, %arg7: memref<1x128xf32, #tpu.memory_space<vmem>>, %arg8: memref<128x128xbf16, #tpu.memory_space<vmem>>, %arg9: memref<1x128xf32, #tpu.memory_space<vmem>>, %arg10: memref<128x128xbf16, #tpu.memory_space<vmem>>, %arg11: memref<1x128xf32, #tpu.memory_space<vmem>>, %arg12: memref<8x128xbf16, #tpu.memory_space<vmem>>, %arg13: memref<8x640xbf16, #tpu.memory_space<vmem>>) attributes {dimension_semantics = [#tpu.dimension_semantics<parallel>], iteration_bounds = array<i64: 1>, scalar_prefetch = 0 : i64, scratch_operands = 1 : i64, tpu.core_type = #tpu.core_type<tc>, window_params = [{transform_indices = @transform_0, window_bounds = array<i64: 8, 611>}, {pipeline_mode = #tpu.pipeline_mode<synchronous>, transform_indices = @transform_1, window_bounds = array<i64: 640, 256>}, {pipeline_mode = #tpu.pipeline_mode<synchronous>, transform_indices = @transform_2, window_bounds = array<i64: 1, 256>}, {pipeline_mode = #tpu.pipeline_mode<synchronous>, transform_indices = @transform_3, window_bounds = array<i64: 256, 128>}, {pipeline_mode = #tpu.pipeline_mode<synchronous>, transform_indices = @transform_4, window_bounds = array<i64: 1, 128>}, {pipeline_mode = #tpu.pipeline_mode<synchronous>, transform_indices = @transform_5, window_bounds = array<i64: 128, 128>}, {pipeline_mode = #tpu.pipeline_mode<synchronous>, transform_indices = @transform_6, window_bounds = array<i64: 1, 128>}, {pipeline_mode = #tpu.pipeline_mode<synchronous>, transform_indices = @transform_7, window_bounds = array<i64: 128, 128>}, {pipeline_mode = #tpu.pipeline_mode<synchronous>, transform_indices = @transform_8, window_bounds = array<i64: 1, 128>}, {pipeline_mode = #tpu.pipeline_mode<synchronous>, transform_indices = @transform_9, window_bounds = array<i64: 128, 128>}, {pipeline_mode = #tpu.pipeline_mode<synchronous>, transform_indices = @transform_10, window_bounds = array<i64: 1, 128>}, {transform_indices = @transform_11, window_bounds = array<i64: 8, 128>}]} {
    %cst = arith.constant 0.000000e+00 : bf16
    %0 = vector.broadcast %cst : bf16 to vector<8x128xbf16>
    %c0 = arith.constant 0 : index
    %c512 = arith.constant 512 : index
    %1 = vector.load %arg13[%c0, %c512] : memref<8x640xbf16, #tpu.memory_space<vmem>>, vector<8x128xbf16>
    tpu.vector_store %arg13[%c0, %c512], %0 {strides = array<i32>} : memref<8x640xbf16, #tpu.memory_space<vmem>>, vector<8x128xbf16>,
    %c0_0 = arith.constant 0 : index
    %c0_1 = arith.constant 0 : index
    %2 = vector.load %arg1[%c0_0, %c0_1] : memref<8x611xf32, #tpu.memory_space<vmem>>, vector<8x611xf32>
    %3 = arith.truncf %2 : vector<8x611xf32> to vector<8x611xbf16>
    %c0_2 = arith.constant 0 : index
    %c0_3 = arith.constant 0 : index
    %4 = vector.load %arg13[%c0_2, %c0_3] : memref<8x640xbf16, #tpu.memory_space<vmem>>, vector<8x611xbf16>
    tpu.vector_store %arg13[%c0_2, %c0_3], %3 {strides = array<i32>} : memref<8x640xbf16, #tpu.memory_space<vmem>>, vector<8x611xbf16>,
    %c0_4 = arith.constant 0 : index
    %c0_5 = arith.constant 0 : index
    %5 = vector.load %arg13[%c0_4, %c0_5] : memref<8x640xbf16, #tpu.memory_space<vmem>>, vector<8x640xbf16>
    %c0_6 = arith.constant 0 : index
    %c0_7 = arith.constant 0 : index
    %6 = vector.load %arg2[%c0_6, %c0_7] : memref<640x256xbf16, #tpu.memory_space<vmem>>, vector<640x256xbf16>
    %cst_8 = arith.constant dense<0.000000e+00> : vector<8x256xf32>
    %7 = tpu.matmul %5, %6, %cst_8 {dimension_numbers = #tpu.dot_dimension_numbers<[1], [0], [0], [1], [0, 0, 1, 1], [], []>} : vector<8x640xbf16>, vector<640x256xbf16>, vector<8x256xf32> -> vector<8x256xf32>
    %c0_9 = arith.constant 0 : index
    %c0_10 = arith.constant 0 : index
    %8 = vector.load %arg3[%c0_9, %c0_10] : memref<1x256xf32, #tpu.memory_space<vmem>>, vector<1x256xf32>
    %9 = vector.broadcast %8 : vector<1x256xf32> to vector<8x256xf32>
    %10 = arith.addf %7, %9 : vector<8x256xf32>
    %cst_11 = arith.constant 0.000000e+00 : f32
    %11 = vector.broadcast %cst_11 : f32 to vector<8x256xf32>
    %12 = arith.maximumf %10, %11 : vector<8x256xf32>
    %13 = arith.truncf %12 : vector<8x256xf32> to vector<8x256xbf16>
    %c0_12 = arith.constant 0 : index
    %c0_13 = arith.constant 0 : index
    %14 = vector.load %arg4[%c0_12, %c0_13] : memref<256x128xbf16, #tpu.memory_space<vmem>>, vector<256x128xbf16>
    %cst_14 = arith.constant dense<0.000000e+00> : vector<8x128xf32>
    %15 = tpu.matmul %13, %14, %cst_14 {dimension_numbers = #tpu.dot_dimension_numbers<[1], [0], [0], [1], [0, 0, 1, 1], [], []>} : vector<8x256xbf16>, vector<256x128xbf16>, vector<8x128xf32> -> vector<8x128xf32>
    %c0_15 = arith.constant 0 : index
    %c0_16 = arith.constant 0 : index
    %16 = vector.load %arg5[%c0_15, %c0_16] : memref<1x128xf32, #tpu.memory_space<vmem>>, vector<1x128xf32>
    %17 = vector.broadcast %16 : vector<1x128xf32> to vector<8x128xf32>
    %18 = arith.addf %15, %17 : vector<8x128xf32>
    %cst_17 = arith.constant 0.000000e+00 : f32
    %19 = vector.broadcast %cst_17 : f32 to vector<8x128xf32>
    %20 = arith.maximumf %18, %19 : vector<8x128xf32>
    %21 = arith.truncf %20 : vector<8x128xf32> to vector<8x128xbf16>
    %c0_18 = arith.constant 0 : index
    %c0_19 = arith.constant 0 : index
    %22 = vector.load %arg6[%c0_18, %c0_19] : memref<128x128xbf16, #tpu.memory_space<vmem>>, vector<128x128xbf16>
    %cst_20 = arith.constant dense<0.000000e+00> : vector<8x128xf32>
    %23 = tpu.matmul %21, %22, %cst_20 {dimension_numbers = #tpu.dot_dimension_numbers<[1], [0], [0], [1], [0, 0, 1, 1], [], []>} : vector<8x128xbf16>, vector<128x128xbf16>, vector<8x128xf32> -> vector<8x128xf32>
    %c0_21 = arith.constant 0 : index
    %c0_22 = arith.constant 0 : index
    %24 = vector.load %arg7[%c0_21, %c0_22] : memref<1x128xf32, #tpu.memory_space<vmem>>, vector<1x128xf32>
    %25 = vector.broadcast %24 : vector<1x128xf32> to vector<8x128xf32>
    %26 = arith.addf %23, %25 : vector<8x128xf32>
    %cst_23 = arith.constant 0.000000e+00 : f32
    %27 = vector.broadcast %cst_23 : f32 to vector<8x128xf32>
    %28 = arith.maximumf %26, %27 : vector<8x128xf32>
    %29 = arith.truncf %28 : vector<8x128xf32> to vector<8x128xbf16>
    %c0_24 = arith.constant 0 : index
    %c0_25 = arith.constant 0 : index
    %30 = vector.load %arg8[%c0_24, %c0_25] : memref<128x128xbf16, #tpu.memory_space<vmem>>, vector<128x128xbf16>
    %cst_26 = arith.constant dense<0.000000e+00> : vector<8x128xf32>
    %31 = tpu.matmul %29, %30, %cst_26 {dimension_numbers = #tpu.dot_dimension_numbers<[1], [0], [0], [1], [0, 0, 1, 1], [], []>} : vector<8x128xbf16>, vector<128x128xbf16>, vector<8x128xf32> -> vector<8x128xf32>
    %c0_27 = arith.constant 0 : index
    %c0_28 = arith.constant 0 : index
    %32 = vector.load %arg9[%c0_27, %c0_28] : memref<1x128xf32, #tpu.memory_space<vmem>>, vector<1x128xf32>
    %33 = vector.broadcast %32 : vector<1x128xf32> to vector<8x128xf32>
    %34 = arith.addf %31, %33 : vector<8x128xf32>
    %cst_29 = arith.constant 0.000000e+00 : f32
    %35 = vector.broadcast %cst_29 : f32 to vector<8x128xf32>
    %36 = arith.maximumf %34, %35 : vector<8x128xf32>
    %37 = arith.truncf %36 : vector<8x128xf32> to vector<8x128xbf16>
    %c0_30 = arith.constant 0 : index
    %c0_31 = arith.constant 0 : index
    %38 = vector.load %arg10[%c0_30, %c0_31] : memref<128x128xbf16, #tpu.memory_space<vmem>>, vector<128x128xbf16>
    %cst_32 = arith.constant dense<0.000000e+00> : vector<8x128xf32>
    %39 = tpu.matmul %37, %38, %cst_32 {dimension_numbers = #tpu.dot_dimension_numbers<[1], [0], [0], [1], [0, 0, 1, 1], [], []>} : vector<8x128xbf16>, vector<128x128xbf16>, vector<8x128xf32> -> vector<8x128xf32>
    %c0_33 = arith.constant 0 : index
    %c0_34 = arith.constant 0 : index
    %40 = vector.load %arg11[%c0_33, %c0_34] : memref<1x128xf32, #tpu.memory_space<vmem>>, vector<1x128xf32>
    %41 = vector.broadcast %40 : vector<1x128xf32> to vector<8x128xf32>
    %42 = arith.addf %39, %41 : vector<8x128xf32>
    %43 = tpu.iota {dimensions = array<i32: 1>} : vector<8x128xi32>
    %c3_i32 = arith.constant 3 : i32
    %44 = vector.broadcast %c3_i32 : i32 to vector<8x128xi32>
    %45 = arith.cmpi slt, %43, %44 : vector<8x128xi32>
    %c3_i32_35 = arith.constant 3 : i32
    %46 = vector.broadcast %c3_i32_35 : i32 to vector<8x128xi32>
    %47 = arith.cmpi eq, %43, %46 : vector<8x128xi32>
    %cst_36 = arith.constant -1.000000e+30 : f32
    %48 = vector.broadcast %cst_36 : f32 to vector<8x128xf32>
    %49 = arith.select %45, %42, %48 : vector<8x128xi1>, vector<8x128xf32>
    %cst_37 = arith.constant dense<0xFF800000> : vector<8xf32>
    %50 = vector.multi_reduction <maximumf>, %49, %cst_37 [1] : vector<8x128xf32> to vector<8xf32>
    %51 = vector.shape_cast %50 : vector<8xf32> to vector<8x1xf32>
    %52 = vector.broadcast %51 : vector<8x1xf32> to vector<8x128xf32>
    %53 = arith.subf %42, %52 : vector<8x128xf32>
    %cst_38 = arith.constant 0.000000e+00 : f32
    %54 = vector.broadcast %cst_38 : f32 to vector<8x128xf32>
    %55 = arith.subf %54, %42 : vector<8x128xf32>
    %cst_39 = arith.constant -1.000000e+30 : f32
    %56 = vector.broadcast %cst_39 : f32 to vector<8x128xf32>
    %57 = arith.select %47, %55, %56 : vector<8x128xi1>, vector<8x128xf32>
    %58 = arith.select %45, %53, %57 : vector<8x128xi1>, vector<8x128xf32>
    %59 = math.exp %58 : vector<8x128xf32>
    %cst_40 = arith.constant 0.000000e+00 : f32
    %60 = vector.broadcast %cst_40 : f32 to vector<8x128xf32>
    %61 = arith.select %45, %59, %60 : vector<8x128xi1>, vector<8x128xf32>
    %cst_41 = arith.constant dense<0.000000e+00> : vector<8xf32>
    %62 = vector.multi_reduction <add>, %61, %cst_41 [1] : vector<8x128xf32> to vector<8xf32>
    %63 = vector.shape_cast %62 : vector<8xf32> to vector<8x1xf32>
    %cst_42 = arith.constant 1.000000e+00 : f32
    %64 = vector.broadcast %cst_42 : f32 to vector<8x1xf32>
    %65 = arith.divf %64, %63 : vector<8x1xf32>
    %66 = vector.broadcast %65 : vector<8x1xf32> to vector<8x128xf32>
    %67 = arith.mulf %59, %66 : vector<8x128xf32>
    %cst_43 = arith.constant 0.000000e+00 : f32
    %68 = vector.broadcast %cst_43 : f32 to vector<8x128xf32>
    %69 = arith.select %47, %59, %68 : vector<8x128xi1>, vector<8x128xf32>
    %cst_44 = arith.constant dense<0.000000e+00> : vector<8xf32>
    %70 = vector.multi_reduction <add>, %69, %cst_44 [1] : vector<8x128xf32> to vector<8xf32>
    %71 = vector.shape_cast %70 : vector<8xf32> to vector<8x1xf32>
    %cst_45 = arith.constant 1.000000e+00 : f32
    %72 = vector.broadcast %cst_45 : f32 to vector<8x1xf32>
    %73 = arith.addf %72, %71 : vector<8x1xf32>
    %74 = tpu.reciprocal %73 {approx = true} : vector<8x1xf32> -> vector<8x1xf32>
    %75 = vector.shape_cast %74 : vector<8x1xf32> to vector<8x1xf32>
    %76 = vector.broadcast %75 : vector<8x1xf32> to vector<8x128xf32>
    %77 = arith.select %47, %76, %42 : vector<8x128xi1>, vector<8x128xf32>
    %78 = arith.select %45, %67, %77 : vector<8x128xi1>, vector<8x128xf32>
    %79 = arith.truncf %78 : vector<8x128xf32> to vector<8x128xbf16>
    %c0_46 = arith.constant 0 : index
    %c0_47 = arith.constant 0 : index
    %80 = vector.load %arg12[%c0_46, %c0_47] : memref<8x128xbf16, #tpu.memory_space<vmem>>, vector<8x128xbf16>
    tpu.vector_store %arg12[%c0_46, %c0_47], %79 {strides = array<i32>} : memref<8x128xbf16, #tpu.memory_space<vmem>>, vector<8x128xbf16>,
    return
  }
  func.func @transform_0(%arg0: i32) -> (i32, i32) {
    %c0_i32 = arith.constant 0 : i32
    %c0_i32_0 = arith.constant 0 : i32
    return %arg0, %c0_i32 : i32, i32
  }
  func.func @transform_1(%arg0: i32) -> (i32, i32) {
    %c0_i32 = arith.constant 0 : i32
    %c0_i32_0 = arith.constant 0 : i32
    %c0_i32_1 = arith.constant 0 : i32
    return %c0_i32, %c0_i32_0 : i32, i32
  }
  func.func @transform_2(%arg0: i32) -> (i32, i32) {
    %c0_i32 = arith.constant 0 : i32
    %c0_i32_0 = arith.constant 0 : i32
    %c0_i32_1 = arith.constant 0 : i32
    return %c0_i32, %c0_i32_0 : i32, i32
  }
  func.func @transform_3(%arg0: i32) -> (i32, i32) {
    %c0_i32 = arith.constant 0 : i32
    %c0_i32_0 = arith.constant 0 : i32
    %c0_i32_1 = arith.constant 0 : i32
    return %c0_i32, %c0_i32_0 : i32, i32
  }
  func.func @transform_4(%arg0: i32) -> (i32, i32) {
    %c0_i32 = arith.constant 0 : i32
    %c0_i32_0 = arith.constant 0 : i32
    %c0_i32_1 = arith.constant 0 : i32
    return %c0_i32, %c0_i32_0 : i32, i32
  }
  func.func @transform_5(%arg0: i32) -> (i32, i32) {
    %c0_i32 = arith.constant 0 : i32
    %c0_i32_0 = arith.constant 0 : i32
    %c0_i32_1 = arith.constant 0 : i32
    return %c0_i32, %c0_i32_0 : i32, i32
  }
  func.func @transform_6(%arg0: i32) -> (i32, i32) {
    %c0_i32 = arith.constant 0 : i32
    %c0_i32_0 = arith.constant 0 : i32
    %c0_i32_1 = arith.constant 0 : i32
    return %c0_i32, %c0_i32_0 : i32, i32
  }
  func.func @transform_7(%arg0: i32) -> (i32, i32) {
    %c0_i32 = arith.constant 0 : i32
    %c0_i32_0 = arith.constant 0 : i32
    %c0_i32_1 = arith.constant 0 : i32
    return %c0_i32, %c0_i32_0 : i32, i32
  }
  func.func @transform_8(%arg0: i32) -> (i32, i32) {
    %c0_i32 = arith.constant 0 : i32
    %c0_i32_0 = arith.constant 0 : i32
    %c0_i32_1 = arith.constant 0 : i32
    return %c0_i32, %c0_i32_0 : i32, i32
  }
  func.func @transform_9(%arg0: i32) -> (i32, i32) {
    %c0_i32 = arith.constant 0 : i32
    %c0_i32_0 = arith.constant 0 : i32
    %c0_i32_1 = arith.constant 0 : i32
    return %c0_i32, %c0_i32_0 : i32, i32
  }
  func.func @transform_10(%arg0: i32) -> (i32, i32) {
    %c0_i32 = arith.constant 0 : i32
    %c0_i32_0 = arith.constant 0 : i32
    %c0_i32_1 = arith.constant 0 : i32
    return %c0_i32, %c0_i32_0 : i32, i32
  }
  func.func @transform_11(%arg0: i32) -> (i32, i32) {
    %c0_i32 = arith.constant 0 : i32
    %c0_i32_0 = arith.constant 0 : i32
    return %arg0, %c0_i32 : i32, i32
  }
}

</mosaic_0001>

<llo_original>
// kernel: tpu_custom_call.1
$region0: #{tpu_custom_call.1}
  #allocation0 [shape = 'u32[]', space=smem, size = 0x4, offset = 0x4, fixed_abs, tag = 'smem constant byte address 0x4 - core index']
  #allocation1 [shape = 'u32[72,128]{1,0:T(1,128)}', space=vmem, size = 0x9000, scoped, tag = 'internal scratch']
  #allocation2 [shape = 'bf16[8,640]{1,0:T(8,128)(2,1)}', space=vmem, size = 0x2800, scoped, tag = 'scratch operand']
  %s0 = inlined_call_operand.hbm [shape: f32[8,611], index: 0, kind: input, shape index: {}]
  %s1 = inlined_call_operand.hbm [shape: bf16[640,256], index: 1, kind: input, shape index: {}]
  %s2 = inlined_call_operand.hbm [shape: f32[1,256], index: 2, kind: input, shape index: {}]
  %s3 = inlined_call_operand.hbm [shape: bf16[256,128], index: 3, kind: input, shape index: {}]
  %s4 = inlined_call_operand.vmem [shape: f32[1,128], index: 4, kind: input, shape index: {}]
  %s5 = inlined_call_operand.hbm [shape: bf16[128,128], index: 5, kind: input, shape index: {}]
  %s6 = inlined_call_operand.vmem [shape: f32[1,128], index: 6, kind: input, shape index: {}]
  %s7 = inlined_call_operand.hbm [shape: bf16[128,128], index: 7, kind: input, shape index: {}]
  %s8 = inlined_call_operand.vmem [shape: f32[1,128], index: 8, kind: input, shape index: {}]
  %s9 = inlined_call_operand.hbm [shape: bf16[128,128], index: 9, kind: input, shape index: {}]
  %s10 = inlined_call_operand.vmem [shape: f32[1,128], index: 10, kind: input, shape index: {}]
  %s11 = inlined_call_operand.hbm [shape: bf16[8,128], index: 11, kind: output, shape index: {}]
  %s12 = sld [smem:[#allocation0]]
  $region82: #{tpu_custom_call.1} parent=0
    _
  %s14 = ssub.s32 1, %s12
  %s15 = scalar_select 0, %s14, %s12
  $region1: #{tpu_custom_call.1} parent=0
    #allocation3 [shape = 'u8[20480]{0}', space=vmem, size = 0x5000, scoped, tag = 'input window, operand 0, single buffered']
    #allocation4 [shape = 's32[1]{0}', space=sflag, size = 0x4, scoped, tag = 'scoped memory for tpu_custom_call.1']
    #allocation5 [shape = 's32[1]{0}', space=sflag, size = 0x4, scoped, tag = 'scoped memory for tpu_custom_call.1']
    #allocation6 [shape = 'u8[327680]{0}', space=vmem, size = 0x50000, scoped, tag = 'input window, operand 1, single buffered']
    #allocation7 [shape = 's32[1]{0}', space=sflag, size = 0x4, scoped, tag = 'scoped memory for tpu_custom_call.1']
    #allocation8 [shape = 'u8[1024]{0}', space=vmem, size = 0x400, scoped, tag = 'input window, operand 2, single buffered']
    #allocation9 [shape = 'u8[65536]{0}', space=vmem, size = 0x10000, scoped, tag = 'input window, operand 3, single buffered']
    #allocation10 [shape = 's32[1]{0}', space=sflag, size = 0x4, scoped, tag = 'scoped memory for tpu_custom_call.1']
    #allocation11 [shape = 'u8[32768]{0}', space=vmem, size = 0x8000, scoped, tag = 'input window, operand 5, single buffered']
    #allocation12 [shape = 'u8[32768]{0}', space=vmem, size = 0x8000, scoped, tag = 'input window, operand 7, single buffered']
    #allocation13 [shape = 's32[1]{0}', space=sflag, size = 0x4, scoped, tag = 'scoped memory for tpu_custom_call.1']
    #allocation14 [shape = 'u8[32768]{0}', space=vmem, size = 0x8000, scoped, tag = 'input window, operand 9, single buffered']
    #allocation15 [shape = 'u8[2048]{0}', space=vmem, size = 0x800, scoped, tag = 'output window, operand 0, single buffered']
    %16 = vsyncpa [#allocation4], 0
    %17 = vsyncpa [#allocation7], 0
    %18 = vsyncpa [#allocation10], 0
    %19 = vsyncpa [#allocation13], 0
    %20 = vsyncpa [#allocation5], 0
    // Predicated region
    $region2: #{tpu_custom_call.1} parent=1 // pred_check
      _
    $region3: #{tpu_custom_call.1} parent=1 // pred_check_branch
      %22 = sbr.rel (0) target = $region5
    $region4: #{tpu_custom_call.1} parent=1 // pred_region
      %24 = vsyncadd [#allocation4], 0
      %s26 = sshll.u32 %s0, 4
      %s27 = int_to_ptr.hbm [resolvable:$true] %s26
      %s28 = sshll.u32 [#allocation3], 4
      %s29 = int_to_ptr.vmem [resolvable:$true] %s28
      %31 = dma.hbm_to_vmem [thread:$0]  %s27, 640, %s29, [#allocation4]
    $region5: #{tpu_custom_call.1} parent=1 // pred_fallthru
      _
    // Predicated region
    $region6: #{tpu_custom_call.1} parent=1 // pred_check
      _
    $region7: #{tpu_custom_call.1} parent=1 // pred_check_branch
      %33 = sbr.rel (0) target = $region9
    $region8: #{tpu_custom_call.1} parent=1 // pred_region
      %35 = vsyncadd [#allocation7], 0
      %s36 = sshll.u32 %s1, 4
      %s37 = int_to_ptr.hbm [resolvable:$true] %s36
      %s38 = sshll.u32 [#allocation6], 4
      %s39 = int_to_ptr.vmem [resolvable:$true] %s38
      %44 = dma.hbm_to_vmem [thread:$0]  %s37, 10240, %s39, [#allocation7], 128, 128, 8
    $region9: #{tpu_custom_call.1} parent=1 // pred_fallthru
      _
    // Predicated region
    $region10: #{tpu_custom_call.1} parent=1 // pred_check
      _
    $region11: #{tpu_custom_call.1} parent=1 // pred_check_branch
      %46 = sbr.rel (0) target = $region13
    $region12: #{tpu_custom_call.1} parent=1 // pred_region
      %48 = vsyncadd [#allocation7], 0
      %s50 = sshll.u32 %s2, 4
      %s51 = int_to_ptr.hbm [resolvable:$true] %s50
      %s52 = sshll.u32 [#allocation8], 4
      %s53 = int_to_ptr.vmem [resolvable:$true] %s52
      %55 = dma.hbm_to_vmem [thread:$0]  %s51, 32, %s53, [#allocation7]
    $region13: #{tpu_custom_call.1} parent=1 // pred_fallthru
      _
    // Predicated region
    $region14: #{tpu_custom_call.1} parent=1 // pred_check
      _
    $region15: #{tpu_custom_call.1} parent=1 // pred_check_branch
      %57 = sbr.rel (0) target = $region17
    $region16: #{tpu_custom_call.1} parent=1 // pred_region
      %59 = vsyncadd [#allocation10], 0
      %s60 = sshll.u32 %s3, 4
      %s61 = int_to_ptr.hbm [resolvable:$true] %s60
      %s62 = sshll.u32 [#allocation9], 4
      %s63 = int_to_ptr.vmem [resolvable:$true] %s62
      %68 = dma.hbm_to_vmem [thread:$0]  %s61, 2048, %s63, [#allocation10], 64, 64, 4
    $region17: #{tpu_custom_call.1} parent=1 // pred_fallthru
      _
    // Predicated region
    $region18: #{tpu_custom_call.1} parent=1 // pred_check
      _
    $region19: #{tpu_custom_call.1} parent=1 // pred_check_branch
      %70 = sbr.rel (0) target = $region21
    $region20: #{tpu_custom_call.1} parent=1 // pred_region
      _
    $region21: #{tpu_custom_call.1} parent=1 // pred_fallthru
      _
    // Predicated region
    $region22: #{tpu_custom_call.1} parent=1 // pred_check
      _
    $region23: #{tpu_custom_call.1} parent=1 // pred_check_branch
      %72 = sbr.rel (0) target = $region25
    $region24: #{tpu_custom_call.1} parent=1 // pred_region
      %74 = vsyncadd [#allocation10], 0
      %s75 = sshll.u32 %s5, 4
      %s76 = int_to_ptr.hbm [resolvable:$true] %s75
      %s77 = sshll.u32 [#allocation11], 4
      %s78 = int_to_ptr.vmem [resolvable:$true] %s77
      %83 = dma.hbm_to_vmem [thread:$0]  %s76, 1024, %s78, [#allocation10], 64, 64, 4
    $region25: #{tpu_custom_call.1} parent=1 // pred_fallthru
      _
    // Predicated region
    $region26: #{tpu_custom_call.1} parent=1 // pred_check
      _
    $region27: #{tpu_custom_call.1} parent=1 // pred_check_branch
      %85 = sbr.rel (0) target = $region29
    $region28: #{tpu_custom_call.1} parent=1 // pred_region
      _
    $region29: #{tpu_custom_call.1} parent=1 // pred_fallthru
      _
    // Predicated region
    $region30: #{tpu_custom_call.1} parent=1 // pred_check
      _
    $region31: #{tpu_custom_call.1} parent=1 // pred_check_branch
      %87 = sbr.rel (0) target = $region33
    $region32: #{tpu_custom_call.1} parent=1 // pred_region
      %89 = vsyncadd [#allocation13], 0
      %s90 = sshll.u32 %s7, 4
      %s91 = int_to_ptr.hbm [resolvable:$true] %s90
      %s92 = sshll.u32 [#allocation12], 4
      %s93 = int_to_ptr.vmem [resolvable:$true] %s92
      %98 = dma.hbm_to_vmem [thread:$0]  %s91, 1024, %s93, [#allocation13], 64, 64, 4
    $region33: #{tpu_custom_call.1} parent=1 // pred_fallthru
      _
    // Predicated region
    $region34: #{tpu_custom_call.1} parent=1 // pred_check
      _
    $region35: #{tpu_custom_call.1} parent=1 // pred_check_branch
      %100 = sbr.rel (0) target = $region37
    $region36: #{tpu_custom_call.1} parent=1 // pred_region
      _
    $region37: #{tpu_custom_call.1} parent=1 // pred_fallthru
      _
    // Predicated region
    $region38: #{tpu_custom_call.1} parent=1 // pred_check
      _
    $region39: #{tpu_custom_call.1} parent=1 // pred_check_branch
      %102 = sbr.rel (0) target = $region41
    $region40: #{tpu_custom_call.1} parent=1 // pred_region
      %104 = vsyncadd [#allocation13], 0
      %s105 = sshll.u32 %s9, 4
      %s106 = int_to_ptr.hbm [resolvable:$true] %s105
      %s107 = sshll.u32 [#allocation14], 4
      %s108 = int_to_ptr.vmem [resolvable:$true] %s107
      %113 = dma.hbm_to_vmem [thread:$0]  %s106, 1024, %s108, [#allocation13], 64, 64, 4
    $region41: #{tpu_custom_call.1} parent=1 // pred_fallthru
      _
    // Predicated region
    $region42: #{tpu_custom_call.1} parent=1 // pred_check
      _
    $region43: #{tpu_custom_call.1} parent=1 // pred_check_branch
      %115 = sbr.rel (0) target = $region45
    $region44: #{tpu_custom_call.1} parent=1 // pred_region
      _
    $region45: #{tpu_custom_call.1} parent=1 // pred_fallthru
      _
    // Predicated region
    $region46: #{tpu_custom_call.1} parent=1 // pred_check
      _
    $region47: #{tpu_custom_call.1} parent=1 // pred_check_branch
      %117 = sbr.rel (0) target = $region49
    $region48: #{tpu_custom_call.1} parent=1 // pred_region
      %119 = dma.done [#allocation4], 640
    $region49: #{tpu_custom_call.1} parent=1 // pred_fallthru
      _
    // Predicated region
    $region50: #{tpu_custom_call.1} parent=1 // pred_check
      _
    $region51: #{tpu_custom_call.1} parent=1 // pred_check_branch
      %121 = sbr.rel (0) target = $region53
    $region52: #{tpu_custom_call.1} parent=1 // pred_region
      %123 = dma.done [#allocation7], 10240
    $region53: #{tpu_custom_call.1} parent=1 // pred_fallthru
      _
    // Predicated region
    $region54: #{tpu_custom_call.1} parent=1 // pred_check
      _
    $region55: #{tpu_custom_call.1} parent=1 // pred_check_branch
      %125 = sbr.rel (0) target = $region57
    $region56: #{tpu_custom_call.1} parent=1 // pred_region
      %127 = dma.done [#allocation7], 32
    $region57: #{tpu_custom_call.1} parent=1 // pred_fallthru
      _
    // Predicated region
    $region58: #{tpu_custom_call.1} parent=1 // pred_check
      _
    $region59: #{tpu_custom_call.1} parent=1 // pred_check_branch
      %129 = sbr.rel (0) target = $region61
    $region60: #{tpu_custom_call.1} parent=1 // pred_region
      %131 = dma.done [#allocation10], 2048
    $region61: #{tpu_custom_call.1} parent=1 // pred_fallthru
      _
    // Predicated region
    $region62: #{tpu_custom_call.1} parent=1 // pred_check
      _
    $region63: #{tpu_custom_call.1} parent=1 // pred_check_branch
      %133 = sbr.rel (0) target = $region65
    $region64: #{tpu_custom_call.1} parent=1 // pred_region
      %135 = dma.done [#allocation10], 1024
    $region65: #{tpu_custom_call.1} parent=1 // pred_fallthru
      _
    // Predicated region
    $region66: #{tpu_custom_call.1} parent=1 // pred_check
      _
    $region67: #{tpu_custom_call.1} parent=1 // pred_check_branch
      %137 = sbr.rel (0) target = $region69
    $region68: #{tpu_custom_call.1} parent=1 // pred_region
      %139 = dma.done [#allocation13], 1024
    $region69: #{tpu_custom_call.1} parent=1 // pred_fallthru
      _
    // Predicated region
    $region70: #{tpu_custom_call.1} parent=1 // pred_check
      _
    $region71: #{tpu_custom_call.1} parent=1 // pred_check_branch
      %141 = sbr.rel (0) target = $region73
    $region72: #{tpu_custom_call.1} parent=1 // pred_region
      %143 = dma.done [#allocation13], 1024
    $region73: #{tpu_custom_call.1} parent=1 // pred_fallthru
      _
    %145 = vst [vmem:[#allocation2 + $0x10] sm:$0xf] 0
    %v146 = vld [vmem:[#allocation3] sm:$0xff]
    %v147 = vld [vmem:[#allocation3 + $0x8] sm:$0xff]
    %v148 = vld [vmem:[#allocation3 + $0x10] sm:$0xff]
    %v149 = vld [vmem:[#allocation3 + $0x18] sm:$0xff]
    %v150 = vld [vmem:[#allocation3 + $0x20] sm:$0xff]
    %v151 = vpack.c.bf16 %v147, %v146
    %v152 = vpack.c.bf16 %v149, %v148
    %v153 = vpack.c.bf16 %v150, %v150
    %154 = vst [vmem:[#allocation2] sm:$0xff] %v151
    %155 = vst [vmem:[#allocation2 + $0x8] sm:$0xff] %v152
    %vm156 = vcmask 805888
    %157 = vst.msk [vmem:[#allocation2 + $0x10] sm:$0xf] %vm156, %v153
    %v158 = vld [vmem:[#allocation2] sm:$0xff]
    %v159 = vld [vmem:[#allocation2 + $0x8] sm:$0xff]
    %v160 = vld [vmem:[#allocation2 + $0x10] sm:$0xf]
    %v161 = vld [vmem:[#allocation6] sm:$0xff]
    %v162 = vld [vmem:[#allocation6 + $0x8] sm:$0xff]
    %v163 = vld [vmem:[#allocation6 + $0x10] sm:$0xff]
    %v164 = vld [vmem:[#allocation6 + $0x18] sm:$0xff]
    %v165 = vld [vmem:[#allocation6 + $0x20] sm:$0xff]
    %v166 = vld [vmem:[#allocation6 + $0x28] sm:$0xff]
    %v167 = vld [vmem:[#allocation6 + $0x30] sm:$0xff]
    %v168 = vld [vmem:[#allocation6 + $0x38] sm:$0xff]
    %v169 = vld [vmem:[#allocation6 + $0x40] sm:$0xff]
    %v170 = vld [vmem:[#allocation6 + $0x48] sm:$0xff]
    %v171 = vld [vmem:[#allocation6 + $0x50] sm:$0xff]
    %v172 = vld [vmem:[#allocation6 + $0x58] sm:$0xff]
    %v173 = vld [vmem:[#allocation6 + $0x60] sm:$0xff]
    %v174 = vld [vmem:[#allocation6 + $0x68] sm:$0xff]
    %v175 = vld [vmem:[#allocation6 + $0x70] sm:$0xff]
    %v176 = vld [vmem:[#allocation6 + $0x78] sm:$0xff]
    %v177 = vld [vmem:[#allocation6 + $0x80] sm:$0xff]
    %v178 = vld [vmem:[#allocation6 + $0x88] sm:$0xff]
    %v179 = vld [vmem:[#allocation6 + $0x90] sm:$0xff]
    %v180 = vld [vmem:[#allocation6 + $0x98] sm:$0xff]
    %v181 = vld [vmem:[#allocation6 + $0xa0] sm:$0xff]
    %v182 = vld [vmem:[#allocation6 + $0xa8] sm:$0xff]
    %v183 = vld [vmem:[#allocation6 + $0xb0] sm:$0xff]
    %v184 = vld [vmem:[#allocation6 + $0xb8] sm:$0xff]
    %v185 = vld [vmem:[#allocation6 + $0xc0] sm:$0xff]
    %v186 = vld [vmem:[#allocation6 + $0xc8] sm:$0xff]
    %v187 = vld [vmem:[#allocation6 + $0xd0] sm:$0xff]
    %v188 = vld [vmem:[#allocation6 + $0xd8] sm:$0xff]
    %v189 = vld [vmem:[#allocation6 + $0xe0] sm:$0xff]
    %v190 = vld [vmem:[#allocation6 + $0xe8] sm:$0xff]
    %v191 = vld [vmem:[#allocation6 + $0xf0] sm:$0xff]
    %v192 = vld [vmem:[#allocation6 + $0xf8] sm:$0xff]
    %v193 = vld [vmem:[#allocation6 + $0x100] sm:$0xff]
    %v194 = vld [vmem:[#allocation6 + $0x108] sm:$0xff]
    %v195 = vld [vmem:[#allocation6 + $0x110] sm:$0xff]
    %v196 = vld [vmem:[#allocation6 + $0x118] sm:$0xff]
    %v197 = vld [vmem:[#allocation6 + $0x120] sm:$0xff]
    %v198 = vld [vmem:[#allocation6 + $0x128] sm:$0xff]
    %v199 = vld [vmem:[#allocation6 + $0x130] sm:$0xff]
    %v200 = vld [vmem:[#allocation6 + $0x138] sm:$0xff]
    %v201 = vld [vmem:[#allocation6 + $0x140] sm:$0xff]
    %v202 = vld [vmem:[#allocation6 + $0x148] sm:$0xff]
    %v203 = vld [vmem:[#allocation6 + $0x150] sm:$0xff]
    %v204 = vld [vmem:[#allocation6 + $0x158] sm:$0xff]
    %v205 = vld [vmem:[#allocation6 + $0x160] sm:$0xff]
    %v206 = vld [vmem:[#allocation6 + $0x168] sm:$0xff]
    %v207 = vld [vmem:[#allocation6 + $0x170] sm:$0xff]
    %v208 = vld [vmem:[#allocation6 + $0x178] sm:$0xff]
    %v209 = vld [vmem:[#allocation6 + $0x180] sm:$0xff]
    %v210 = vld [vmem:[#allocation6 + $0x188] sm:$0xff]
    %v211 = vld [vmem:[#allocation6 + $0x190] sm:$0xff]
    %v212 = vld [vmem:[#allocation6 + $0x198] sm:$0xff]
    %v213 = vld [vmem:[#allocation6 + $0x1a0] sm:$0xff]
    %v214 = vld [vmem:[#allocation6 + $0x1a8] sm:$0xff]
    %v215 = vld [vmem:[#allocation6 + $0x1b0] sm:$0xff]
    %v216 = vld [vmem:[#allocation6 + $0x1b8] sm:$0xff]
    %v217 = vld [vmem:[#allocation6 + $0x1c0] sm:$0xff]
    %v218 = vld [vmem:[#allocation6 + $0x1c8] sm:$0xff]
    %v219 = vld [vmem:[#allocation6 + $0x1d0] sm:$0xff]
    %v220 = vld [vmem:[#allocation6 + $0x1d8] sm:$0xff]
    %v221 = vld [vmem:[#allocation6 + $0x1e0] sm:$0xff]
    %v222 = vld [vmem:[#allocation6 + $0x1e8] sm:$0xff]
    %v223 = vld [vmem:[#allocation6 + $0x1f0] sm:$0xff]
    %v224 = vld [vmem:[#allocation6 + $0x1f8] sm:$0xff]
    %v225 = vld [vmem:[#allocation6 + $0x200] sm:$0xff]
    %v226 = vld [vmem:[#allocation6 + $0x208] sm:$0xff]
    %v227 = vld [vmem:[#allocation6 + $0x210] sm:$0xff]
    %v228 = vld [vmem:[#allocation6 + $0x218] sm:$0xff]
    %v229 = vld [vmem:[#allocation6 + $0x220] sm:$0xff]
    %v230 = vld [vmem:[#allocation6 + $0x228] sm:$0xff]
    %v231 = vld [vmem:[#allocation6 + $0x230] sm:$0xff]
    %v232 = vld [vmem:[#allocation6 + $0x238] sm:$0xff]
    %v233 = vld [vmem:[#allocation6 + $0x240] sm:$0xff]
    %v234 = vld [vmem:[#allocation6 + $0x248] sm:$0xff]
    %v235 = vld [vmem:[#allocation6 + $0x250] sm:$0xff]
    %v236 = vld [vmem:[#allocation6 + $0x258] sm:$0xff]
    %v237 = vld [vmem:[#allocation6 + $0x260] sm:$0xff]
    %v238 = vld [vmem:[#allocation6 + $0x268] sm:$0xff]
    %v239 = vld [vmem:[#allocation6 + $0x270] sm:$0xff]
    %v240 = vld [vmem:[#allocation6 + $0x278] sm:$0xff]
    %v241 = vld [vmem:[#allocation8] sm:$0x3]
    %v243 = vperm.slane %v241, 0
    %v244 = vperm.slane %v241, 1
    %v250 = vunpack.c.l.b16 %v158
    %v251 = vunpack.c.h.b16 %v158
    %v252 = vunpack.c.l.b16 %v159
    %v253 = vunpack.c.h.b16 %v159
    %v254 = vunpack.c.l.b16 %v160
    %v255 = vpack.c.b16 %v250, %v250
    %v256 = vpack.c.b16 %v251, %v251
    %v257 = vpack.c.b16 %v252, %v252
    %v258 = vpack.c.b16 %v253, %v253
    %v259 = vpack.c.b16 %v254, %v254
    %v345 = vunpack.c.l.b16 %v161
    %v346 = vunpack.c.h.b16 %v161
    %v347 = vunpack.c.l.b16 %v162
    %v348 = vunpack.c.h.b16 %v162
    %v349 = vunpack.c.l.b16 %v163
    %v350 = vunpack.c.h.b16 %v163
    %v351 = vunpack.c.l.b16 %v164
    %v352 = vunpack.c.h.b16 %v164
    %v353 = vunpack.c.l.b16 %v165
    %v354 = vunpack.c.h.b16 %v165
    %v355 = vunpack.c.l.b16 %v166
    %v356 = vunpack.c.h.b16 %v166
    %v357 = vunpack.c.l.b16 %v167
    %v358 = vunpack.c.h.b16 %v167
    %v359 = vunpack.c.l.b16 %v168
    %v360 = vunpack.c.h.b16 %v168
    %v361 = vunpack.c.l.b16 %v169
    %v362 = vunpack.c.h.b16 %v169
    %v363 = vunpack.c.l.b16 %v170
    %v364 = vunpack.c.h.b16 %v170
    %v365 = vunpack.c.l.b16 %v171
    %v366 = vunpack.c.h.b16 %v171
    %v367 = vunpack.c.l.b16 %v172
    %v368 = vunpack.c.h.b16 %v172
    %v369 = vunpack.c.l.b16 %v173
    %v370 = vunpack.c.h.b16 %v173
    %v371 = vunpack.c.l.b16 %v174
    %v372 = vunpack.c.h.b16 %v174
    %v373 = vunpack.c.l.b16 %v175
    %v374 = vunpack.c.h.b16 %v175
    %v375 = vunpack.c.l.b16 %v176
    %v376 = vunpack.c.h.b16 %v176
    %v377 = vunpack.c.l.b16 %v177
    %v378 = vunpack.c.h.b16 %v177
    %v379 = vunpack.c.l.b16 %v178
    %v380 = vunpack.c.h.b16 %v178
    %v381 = vunpack.c.l.b16 %v179
    %v382 = vunpack.c.h.b16 %v179
    %v383 = vunpack.c.l.b16 %v180
    %v384 = vunpack.c.h.b16 %v180
    %v385 = vunpack.c.l.b16 %v181
    %v386 = vunpack.c.h.b16 %v181
    %v387 = vunpack.c.l.b16 %v182
    %v388 = vunpack.c.h.b16 %v182
    %v389 = vunpack.c.l.b16 %v183
    %v390 = vunpack.c.h.b16 %v183
    %v391 = vunpack.c.l.b16 %v184
    %v392 = vunpack.c.h.b16 %v184
    %v393 = vunpack.c.l.b16 %v185
    %v394 = vunpack.c.h.b16 %v185
    %v395 = vunpack.c.l.b16 %v186
    %v396 = vunpack.c.h.b16 %v186
    %v397 = vunpack.c.l.b16 %v187
    %v398 = vunpack.c.h.b16 %v187
    %v399 = vunpack.c.l.b16 %v188
    %v400 = vunpack.c.h.b16 %v188
    %v401 = vunpack.c.l.b16 %v189
    %v402 = vunpack.c.h.b16 %v189
    %v403 = vunpack.c.l.b16 %v190
    %v404 = vunpack.c.h.b16 %v190
    %v405 = vunpack.c.l.b16 %v191
    %v406 = vunpack.c.h.b16 %v191
    %v407 = vunpack.c.l.b16 %v192
    %v408 = vunpack.c.h.b16 %v192
    %v409 = vunpack.c.l.b16 %v193
    %v410 = vunpack.c.h.b16 %v193
    %v411 = vunpack.c.l.b16 %v194
    %v412 = vunpack.c.h.b16 %v194
    %v413 = vunpack.c.l.b16 %v195
    %v414 = vunpack.c.h.b16 %v195
    %v415 = vunpack.c.l.b16 %v196
    %v416 = vunpack.c.h.b16 %v196
    %v417 = vunpack.c.l.b16 %v197
    %v418 = vunpack.c.h.b16 %v197
    %v419 = vunpack.c.l.b16 %v198
    %v420 = vunpack.c.h.b16 %v198
    %v421 = vunpack.c.l.b16 %v199
    %v422 = vunpack.c.h.b16 %v199
    %v423 = vunpack.c.l.b16 %v200
    %v424 = vunpack.c.h.b16 %v200
    %v425 = vunpack.c.l.b16 %v201
    %v426 = vunpack.c.h.b16 %v201
    %v427 = vunpack.c.l.b16 %v202
    %v428 = vunpack.c.h.b16 %v202
    %v429 = vunpack.c.l.b16 %v203
    %v430 = vunpack.c.h.b16 %v203
    %v431 = vunpack.c.l.b16 %v204
    %v432 = vunpack.c.h.b16 %v204
    %v433 = vunpack.c.l.b16 %v205
    %v434 = vunpack.c.h.b16 %v205
    %v435 = vunpack.c.l.b16 %v206
    %v436 = vunpack.c.h.b16 %v206
    %v437 = vunpack.c.l.b16 %v207
    %v438 = vunpack.c.h.b16 %v207
    %v439 = vunpack.c.l.b16 %v208
    %v440 = vunpack.c.h.b16 %v208
    %v441 = vunpack.c.l.b16 %v209
    %v442 = vunpack.c.h.b16 %v209
    %v443 = vunpack.c.l.b16 %v210
    %v444 = vunpack.c.h.b16 %v210
    %v445 = vunpack.c.l.b16 %v211
    %v446 = vunpack.c.h.b16 %v211
    %v447 = vunpack.c.l.b16 %v212
    %v448 = vunpack.c.h.b16 %v212
    %v449 = vunpack.c.l.b16 %v213
    %v450 = vunpack.c.h.b16 %v213
    %v451 = vunpack.c.l.b16 %v214
    %v452 = vunpack.c.h.b16 %v214
    %v453 = vunpack.c.l.b16 %v215
    %v454 = vunpack.c.h.b16 %v215
    %v455 = vunpack.c.l.b16 %v216
    %v456 = vunpack.c.h.b16 %v216
    %v457 = vunpack.c.l.b16 %v217
    %v458 = vunpack.c.h.b16 %v217
    %v459 = vunpack.c.l.b16 %v218
    %v460 = vunpack.c.h.b16 %v218
    %v461 = vunpack.c.l.b16 %v219
    %v462 = vunpack.c.h.b16 %v219
    %v463 = vunpack.c.l.b16 %v220
    %v464 = vunpack.c.h.b16 %v220
    %v465 = vunpack.c.l.b16 %v221
    %v466 = vunpack.c.h.b16 %v221
    %v467 = vunpack.c.l.b16 %v222
    %v468 = vunpack.c.h.b16 %v222
    %v469 = vunpack.c.l.b16 %v223
    %v470 = vunpack.c.h.b16 %v223
    %v471 = vunpack.c.l.b16 %v224
    %v472 = vunpack.c.h.b16 %v224
    %v473 = vunpack.c.l.b16 %v225
    %v474 = vunpack.c.h.b16 %v225
    %v475 = vunpack.c.l.b16 %v226
    %v476 = vunpack.c.h.b16 %v226
    %v477 = vunpack.c.l.b16 %v227
    %v478 = vunpack.c.h.b16 %v227
    %v479 = vunpack.c.l.b16 %v228
    %v480 = vunpack.c.h.b16 %v228
    %v481 = vunpack.c.l.b16 %v229
    %v482 = vunpack.c.h.b16 %v229
    %v483 = vunpack.c.l.b16 %v230
    %v484 = vunpack.c.h.b16 %v230
    %v485 = vunpack.c.l.b16 %v231
    %v486 = vunpack.c.h.b16 %v231
    %v487 = vunpack.c.l.b16 %v232
    %v488 = vunpack.c.h.b16 %v232
    %v489 = vunpack.c.l.b16 %v233
    %v490 = vunpack.c.h.b16 %v233
    %v491 = vunpack.c.l.b16 %v234
    %v492 = vunpack.c.h.b16 %v234
    %v493 = vunpack.c.l.b16 %v235
    %v494 = vunpack.c.h.b16 %v235
    %v495 = vunpack.c.l.b16 %v236
    %v496 = vunpack.c.h.b16 %v236
    %v497 = vunpack.c.l.b16 %v237
    %v498 = vunpack.c.h.b16 %v237
    %v499 = vunpack.c.l.b16 %v238
    %v500 = vunpack.c.h.b16 %v238
    %v501 = vunpack.c.l.b16 %v239
    %v502 = vunpack.c.h.b16 %v239
    %v503 = vunpack.c.l.b16 %v240
    %v504 = vunpack.c.h.b16 %v240
    %v505 = vpack.c.b16 %v347, %v345
    %v506 = vpack.c.b16 %v348, %v346
    %v507 = vpack.c.b16 %v351, %v349
    %v508 = vpack.c.b16 %v352, %v350
    %v509 = vpack.c.b16 %v355, %v353
    %v510 = vpack.c.b16 %v356, %v354
    %v511 = vpack.c.b16 %v359, %v357
    %v512 = vpack.c.b16 %v360, %v358
    %v513 = vpack.c.b16 %v363, %v361
    %v514 = vpack.c.b16 %v364, %v362
    %v515 = vpack.c.b16 %v367, %v365
    %v516 = vpack.c.b16 %v368, %v366
    %v517 = vpack.c.b16 %v371, %v369
    %v518 = vpack.c.b16 %v372, %v370
    %v519 = vpack.c.b16 %v375, %v373
    %v520 = vpack.c.b16 %v376, %v374
    %v521 = vpack.c.b16 %v379, %v377
    %v522 = vpack.c.b16 %v380, %v378
    %v523 = vpack.c.b16 %v383, %v381
    %v524 = vpack.c.b16 %v384, %v382
    %v525 = vpack.c.b16 %v387, %v385
    %v526 = vpack.c.b16 %v388, %v386
    %v527 = vpack.c.b16 %v391, %v389
    %v528 = vpack.c.b16 %v392, %v390
    %v529 = vpack.c.b16 %v395, %v393
    %v530 = vpack.c.b16 %v396, %v394
    %v531 = vpack.c.b16 %v399, %v397
    %v532 = vpack.c.b16 %v400, %v398
    %v533 = vpack.c.b16 %v403, %v401
    %v534 = vpack.c.b16 %v404, %v402
    %v535 = vpack.c.b16 %v407, %v405
    %v536 = vpack.c.b16 %v408, %v406
    %v537 = vpack.c.b16 %v411, %v409
    %v538 = vpack.c.b16 %v412, %v410
    %v539 = vpack.c.b16 %v415, %v413
    %v540 = vpack.c.b16 %v416, %v414
    %v541 = vpack.c.b16 %v419, %v417
    %v542 = vpack.c.b16 %v420, %v418
    %v543 = vpack.c.b16 %v423, %v421
    %v544 = vpack.c.b16 %v424, %v422
    %v545 = vpack.c.b16 %v427, %v425
    %v546 = vpack.c.b16 %v428, %v426
    %v547 = vpack.c.b16 %v431, %v429
    %v548 = vpack.c.b16 %v432, %v430
    %v549 = vpack.c.b16 %v435, %v433
    %v550 = vpack.c.b16 %v436, %v434
    %v551 = vpack.c.b16 %v439, %v437
    %v552 = vpack.c.b16 %v440, %v438
    %v553 = vpack.c.b16 %v443, %v441
    %v554 = vpack.c.b16 %v444, %v442
    %v555 = vpack.c.b16 %v447, %v445
    %v556 = vpack.c.b16 %v448, %v446
    %v557 = vpack.c.b16 %v451, %v449
    %v558 = vpack.c.b16 %v452, %v450
    %v559 = vpack.c.b16 %v455, %v453
    %v560 = vpack.c.b16 %v456, %v454
    %v561 = vpack.c.b16 %v459, %v457
    %v562 = vpack.c.b16 %v460, %v458
    %v563 = vpack.c.b16 %v463, %v461
    %v564 = vpack.c.b16 %v464, %v462
    %v565 = vpack.c.b16 %v467, %v465
    %v566 = vpack.c.b16 %v468, %v466
    %v567 = vpack.c.b16 %v471, %v469
    %v568 = vpack.c.b16 %v472, %v470
    %v569 = vpack.c.b16 %v475, %v473
    %v570 = vpack.c.b16 %v476, %v474
    %v571 = vpack.c.b16 %v479, %v477
    %v572 = vpack.c.b16 %v480, %v478
    %v573 = vpack.c.b16 %v483, %v481
    %v574 = vpack.c.b16 %v484, %v482
    %v575 = vpack.c.b16 %v487, %v485
    %v576 = vpack.c.b16 %v488, %v486
    %v577 = vpack.c.b16 %v491, %v489
    %v578 = vpack.c.b16 %v492, %v490
    %v579 = vpack.c.b16 %v495, %v493
    %v580 = vpack.c.b16 %v496, %v494
    %v581 = vpack.c.b16 %v499, %v497
    %v582 = vpack.c.b16 %v500, %v498
    %v583 = vpack.c.b16 %v503, %v501
    %v584 = vpack.c.b16 %v504, %v502
    %665 = vmatpush.bf16.msra.mxu0 %v519
    %666 = vmatpush.bf16.msra.mxu0 %v517
    %667 = vmatpush.bf16.msra.mxu0 %v515
    %668 = vmatpush.bf16.msra.mxu0 %v513
    %669 = vmatpush.bf16.msra.mxu0 %v511
    %670 = vmatpush.bf16.msra.mxu0 %v509
    %671 = vmatpush.bf16.msra.mxu0 %v507
    %672 = vmatpush.bf16.msra.mxu0 %v505
    %673 = vmatmul.bf16.gmra.mxu0 %v255
    %v674 = vpop.f32.mrf.mxu0
    %v675 = vadd.f32 %v243, %v674
    %v676 = vpop.f32.mrf.mxu0
    %677 = vdwg.mxu0
    %678 = vmatpush.bf16.msra.mxu0 %v535
    %679 = vmatpush.bf16.msra.mxu0 %v533
    %680 = vmatpush.bf16.msra.mxu0 %v531
    %681 = vmatpush.bf16.msra.mxu0 %v529
    %682 = vmatpush.bf16.msra.mxu0 %v527
    %683 = vmatpush.bf16.msra.mxu0 %v525
    %684 = vmatpush.bf16.msra.mxu0 %v523
    %685 = vmatpush.bf16.msra.mxu0 %v521
    %686 = vmatmul.bf16.gmra.mxu0 %v256
    %v687 = vpop.f32.mrf.mxu0
    %v688 = vadd.f32 %v675, %v687
    %v689 = vpop.f32.mrf.mxu0
    %690 = vdwg.mxu0
    %691 = vmatpush.bf16.msra.mxu0 %v551
    %692 = vmatpush.bf16.msra.mxu0 %v549
    %693 = vmatpush.bf16.msra.mxu0 %v547
    %694 = vmatpush.bf16.msra.mxu0 %v545
    %695 = vmatpush.bf16.msra.mxu0 %v543
    %696 = vmatpush.bf16.msra.mxu0 %v541
    %697 = vmatpush.bf16.msra.mxu0 %v539
    %698 = vmatpush.bf16.msra.mxu0 %v537
    %699 = vmatmul.bf16.gmra.mxu0 %v257
    %v700 = vpop.f32.mrf.mxu0
    %v701 = vadd.f32 %v688, %v700
    %v702 = vpop.f32.mrf.mxu0
    %703 = vdwg.mxu0
    %704 = vmatpush.bf16.msra.mxu0 %v567
    %705 = vmatpush.bf16.msra.mxu0 %v565
    %706 = vmatpush.bf16.msra.mxu0 %v563
    %707 = vmatpush.bf16.msra.mxu0 %v561
    %708 = vmatpush.bf16.msra.mxu0 %v559
    %709 = vmatpush.bf16.msra.mxu0 %v557
    %710 = vmatpush.bf16.msra.mxu0 %v555
    %711 = vmatpush.bf16.msra.mxu0 %v553
    %712 = vmatmul.bf16.gmra.mxu0 %v258
    %v713 = vpop.f32.mrf.mxu0
    %v714 = vadd.f32 %v701, %v713
    %v715 = vpop.f32.mrf.mxu0
    %716 = vdwg.mxu0
    %717 = vmatpush.bf16.msra.mxu0 %v583
    %718 = vmatpush.bf16.msra.mxu0 %v581
    %719 = vmatpush.bf16.msra.mxu0 %v579
    %720 = vmatpush.bf16.msra.mxu0 %v577
    %721 = vmatpush.bf16.msra.mxu0 %v575
    %722 = vmatpush.bf16.msra.mxu0 %v573
    %723 = vmatpush.bf16.msra.mxu0 %v571
    %724 = vmatpush.bf16.msra.mxu0 %v569
    %725 = vmatmul.bf16.gmra.mxu0 %v259
    %v726 = vpop.f32.mrf.mxu0
    %v727 = vadd.f32 %v714, %v726
    %v728 = vpop.f32.mrf.mxu0
    %729 = vdwg.mxu0
    %730 = vmatpush.bf16.msra.mxu0 %v520
    %731 = vmatpush.bf16.msra.mxu0 %v518
    %732 = vmatpush.bf16.msra.mxu0 %v516
    %733 = vmatpush.bf16.msra.mxu0 %v514
    %734 = vmatpush.bf16.msra.mxu0 %v512
    %735 = vmatpush.bf16.msra.mxu0 %v510
    %736 = vmatpush.bf16.msra.mxu0 %v508
    %737 = vmatpush.bf16.msra.mxu0 %v506
    %738 = vmatmul.bf16.gmra.mxu0 %v255
    %v739 = vpop.f32.mrf.mxu0
    %v740 = vadd.f32 %v244, %v739
    %v741 = vpop.f32.mrf.mxu0
    %742 = vdwg.mxu0
    %743 = vmatpush.bf16.msra.mxu0 %v536
    %744 = vmatpush.bf16.msra.mxu0 %v534
    %745 = vmatpush.bf16.msra.mxu0 %v532
    %746 = vmatpush.bf16.msra.mxu0 %v530
    %747 = vmatpush.bf16.msra.mxu0 %v528
    %748 = vmatpush.bf16.msra.mxu0 %v526
    %749 = vmatpush.bf16.msra.mxu0 %v524
    %750 = vmatpush.bf16.msra.mxu0 %v522
    %751 = vmatmul.bf16.gmra.mxu0 %v256
    %v752 = vpop.f32.mrf.mxu0
    %v753 = vadd.f32 %v740, %v752
    %v754 = vpop.f32.mrf.mxu0
    %755 = vdwg.mxu0
    %756 = vmatpush.bf16.msra.mxu0 %v552
    %757 = vmatpush.bf16.msra.mxu0 %v550
    %758 = vmatpush.bf16.msra.mxu0 %v548
    %759 = vmatpush.bf16.msra.mxu0 %v546
    %760 = vmatpush.bf16.msra.mxu0 %v544
    %761 = vmatpush.bf16.msra.mxu0 %v542
    %762 = vmatpush.bf16.msra.mxu0 %v540
    %763 = vmatpush.bf16.msra.mxu0 %v538
    %764 = vmatmul.bf16.gmra.mxu0 %v257
    %v765 = vpop.f32.mrf.mxu0
    %v766 = vadd.f32 %v753, %v765
    %v767 = vpop.f32.mrf.mxu0
    %768 = vdwg.mxu0
    %769 = vmatpush.bf16.msra.mxu0 %v568
    %770 = vmatpush.bf16.msra.mxu0 %v566
    %771 = vmatpush.bf16.msra.mxu0 %v564
    %772 = vmatpush.bf16.msra.mxu0 %v562
    %773 = vmatpush.bf16.msra.mxu0 %v560
    %774 = vmatpush.bf16.msra.mxu0 %v558
    %775 = vmatpush.bf16.msra.mxu0 %v556
    %776 = vmatpush.bf16.msra.mxu0 %v554
    %777 = vmatmul.bf16.gmra.mxu0 %v258
    %v778 = vpop.f32.mrf.mxu0
    %v779 = vadd.f32 %v766, %v778
    %v780 = vpop.f32.mrf.mxu0
    %781 = vdwg.mxu0
    %782 = vmatpush.bf16.msra.mxu0 %v584
    %783 = vmatpush.bf16.msra.mxu0 %v582
    %784 = vmatpush.bf16.msra.mxu0 %v580
    %785 = vmatpush.bf16.msra.mxu0 %v578
    %786 = vmatpush.bf16.msra.mxu0 %v576
    %787 = vmatpush.bf16.msra.mxu0 %v574
    %788 = vmatpush.bf16.msra.mxu0 %v572
    %789 = vmatpush.bf16.msra.mxu0 %v570
    %790 = vmatmul.bf16.gmra.mxu0 %v259
    %v791 = vpop.f32.mrf.mxu0
    %v792 = vadd.f32 %v779, %v791
    %v793 = vpop.f32.mrf.mxu0
    %794 = vdwg.mxu0
    %v795 = vmax.f32 %v727, 0.0
    %v796 = vmax.f32 %v792, 0.0
    %v797 = vpack.c.bf16 %v795, %v795
    %v798 = vpack.c.bf16 %v796, %v796
    %v799 = vld [vmem:[#allocation9] sm:$0xf]
    %v800 = vld [vmem:[#allocation9 + $0x4] sm:$0xf]
    %v801 = vld [vmem:[#allocation9 + $0x8] sm:$0xf]
    %v802 = vld [vmem:[#allocation9 + $0xc] sm:$0xf]
    %v803 = vld [vmem:[#allocation9 + $0x10] sm:$0xf]
    %v804 = vld [vmem:[#allocation9 + $0x14] sm:$0xf]
    %v805 = vld [vmem:[#allocation9 + $0x18] sm:$0xf]
    %v806 = vld [vmem:[#allocation9 + $0x1c] sm:$0xf]
    %v807 = vld [vmem:[#allocation9 + $0x20] sm:$0xf]
    %v808 = vld [vmem:[#allocation9 + $0x24] sm:$0xf]
    %v809 = vld [vmem:[#allocation9 + $0x28] sm:$0xf]
    %v810 = vld [vmem:[#allocation9 + $0x2c] sm:$0xf]
    %v811 = vld [vmem:[#allocation9 + $0x30] sm:$0xf]
    %v812 = vld [vmem:[#allocation9 + $0x34] sm:$0xf]
    %v813 = vld [vmem:[#allocation9 + $0x38] sm:$0xf]
    %v814 = vld [vmem:[#allocation9 + $0x3c] sm:$0xf]
    %v815 = vld [vmem:[#allocation9 + $0x40] sm:$0xf]
    %v816 = vld [vmem:[#allocation9 + $0x44] sm:$0xf]
    %v817 = vld [vmem:[#allocation9 + $0x48] sm:$0xf]
    %v818 = vld [vmem:[#allocation9 + $0x4c] sm:$0xf]
    %v819 = vld [vmem:[#allocation9 + $0x50] sm:$0xf]
    %v820 = vld [vmem:[#allocation9 + $0x54] sm:$0xf]
    %v821 = vld [vmem:[#allocation9 + $0x58] sm:$0xf]
    %v822 = vld [vmem:[#allocation9 + $0x5c] sm:$0xf]
    %v823 = vld [vmem:[#allocation9 + $0x60] sm:$0xf]
    %v824 = vld [vmem:[#allocation9 + $0x64] sm:$0xf]
    %v825 = vld [vmem:[#allocation9 + $0x68] sm:$0xf]
    %v826 = vld [vmem:[#allocation9 + $0x6c] sm:$0xf]
    %v827 = vld [vmem:[#allocation9 + $0x70] sm:$0xf]
    %v828 = vld [vmem:[#allocation9 + $0x74] sm:$0xf]
    %v829 = vld [vmem:[#allocation9 + $0x78] sm:$0xf]
    %v830 = vld [vmem:[#allocation9 + $0x7c] sm:$0xf]
    %v831 = vld [vmem:[%s4] sm:$0x1]
    %v833 = vperm.slane %v831, 0
    %v867 = vunpack.c.l.b16 %v799
    %v868 = vunpack.c.l.b16 %v800
    %v869 = vunpack.c.l.b16 %v801
    %v870 = vunpack.c.l.b16 %v802
    %v871 = vunpack.c.l.b16 %v803
    %v872 = vunpack.c.l.b16 %v804
    %v873 = vunpack.c.l.b16 %v805
    %v874 = vunpack.c.l.b16 %v806
    %v875 = vunpack.c.l.b16 %v807
    %v876 = vunpack.c.l.b16 %v808
    %v877 = vunpack.c.l.b16 %v809
    %v878 = vunpack.c.l.b16 %v810
    %v879 = vunpack.c.l.b16 %v811
    %v880 = vunpack.c.l.b16 %v812
    %v881 = vunpack.c.l.b16 %v813
    %v882 = vunpack.c.l.b16 %v814
    %v883 = vunpack.c.l.b16 %v815
    %v884 = vunpack.c.l.b16 %v816
    %v885 = vunpack.c.l.b16 %v817
    %v886 = vunpack.c.l.b16 %v818
    %v887 = vunpack.c.l.b16 %v819
    %v888 = vunpack.c.l.b16 %v820
    %v889 = vunpack.c.l.b16 %v821
    %v890 = vunpack.c.l.b16 %v822
    %v891 = vunpack.c.l.b16 %v823
    %v892 = vunpack.c.l.b16 %v824
    %v893 = vunpack.c.l.b16 %v825
    %v894 = vunpack.c.l.b16 %v826
    %v895 = vunpack.c.l.b16 %v827
    %v896 = vunpack.c.l.b16 %v828
    %v897 = vunpack.c.l.b16 %v829
    %v898 = vunpack.c.l.b16 %v830
    %v899 = vpack.c.b16 %v868, %v867
    %v900 = vpack.c.b16 %v870, %v869
    %v901 = vpack.c.b16 %v872, %v871
    %v902 = vpack.c.b16 %v874, %v873
    %v903 = vpack.c.b16 %v876, %v875
    %v904 = vpack.c.b16 %v878, %v877
    %v905 = vpack.c.b16 %v880, %v879
    %v906 = vpack.c.b16 %v882, %v881
    %v907 = vpack.c.b16 %v884, %v883
    %v908 = vpack.c.b16 %v886, %v885
    %v909 = vpack.c.b16 %v888, %v887
    %v910 = vpack.c.b16 %v890, %v889
    %v911 = vpack.c.b16 %v892, %v891
    %v912 = vpack.c.b16 %v894, %v893
    %v913 = vpack.c.b16 %v896, %v895
    %v914 = vpack.c.b16 %v898, %v897
    %931 = vmatpush.bf16.msra.mxu0 %v906
    %932 = vmatpush.bf16.msra.mxu0 %v905
    %933 = vmatpush.bf16.msra.mxu0 %v904
    %934 = vmatpush.bf16.msra.mxu0 %v903
    %935 = vmatpush.bf16.msra.mxu0 %v902
    %936 = vmatpush.bf16.msra.mxu0 %v901
    %937 = vmatpush.bf16.msra.mxu0 %v900
    %938 = vmatpush.bf16.msra.mxu0 %v899
    %939 = vmatmul.bf16.gmra.mxu0 %v797
    %v940 = vpop.f32.mrf.mxu0
    %v941 = vadd.f32 %v833, %v940
    %v942 = vpop.f32.mrf.mxu0
    %943 = vdwg.mxu0
    %944 = vmatpush.bf16.msra.mxu0 %v914
    %945 = vmatpush.bf16.msra.mxu0 %v913
    %946 = vmatpush.bf16.msra.mxu0 %v912
    %947 = vmatpush.bf16.msra.mxu0 %v911
    %948 = vmatpush.bf16.msra.mxu0 %v910
    %949 = vmatpush.bf16.msra.mxu0 %v909
    %950 = vmatpush.bf16.msra.mxu0 %v908
    %951 = vmatpush.bf16.msra.mxu0 %v907
    %952 = vmatmul.bf16.gmra.mxu0 %v798
    %v953 = vpop.f32.mrf.mxu0
    %v954 = vadd.f32 %v941, %v953
    %v955 = vpop.f32.mrf.mxu0
    %956 = vdwg.mxu0
    %v957 = vmax.f32 %v954, 0.0
    %v958 = vpack.c.bf16 %v957, %v957
    %v959 = vld [vmem:[#allocation11] sm:$0xf]
    %v960 = vld [vmem:[#allocation11 + $0x4] sm:$0xf]
    %v961 = vld [vmem:[#allocation11 + $0x8] sm:$0xf]
    %v962 = vld [vmem:[#allocation11 + $0xc] sm:$0xf]
    %v963 = vld [vmem:[#allocation11 + $0x10] sm:$0xf]
    %v964 = vld [vmem:[#allocation11 + $0x14] sm:$0xf]
    %v965 = vld [vmem:[#allocation11 + $0x18] sm:$0xf]
    %v966 = vld [vmem:[#allocation11 + $0x1c] sm:$0xf]
    %v967 = vld [vmem:[#allocation11 + $0x20] sm:$0xf]
    %v968 = vld [vmem:[#allocation11 + $0x24] sm:$0xf]
    %v969 = vld [vmem:[#allocation11 + $0x28] sm:$0xf]
    %v970 = vld [vmem:[#allocation11 + $0x2c] sm:$0xf]
    %v971 = vld [vmem:[#allocation11 + $0x30] sm:$0xf]
    %v972 = vld [vmem:[#allocation11 + $0x34] sm:$0xf]
    %v973 = vld [vmem:[#allocation11 + $0x38] sm:$0xf]
    %v974 = vld [vmem:[#allocation11 + $0x3c] sm:$0xf]
    %v975 = vld [vmem:[%s6] sm:$0x1]
    %v977 = vperm.slane %v975, 0
    %v995 = vunpack.c.l.b16 %v959
    %v996 = vunpack.c.l.b16 %v960
    %v997 = vunpack.c.l.b16 %v961
    %v998 = vunpack.c.l.b16 %v962
    %v999 = vunpack.c.l.b16 %v963
    %v1000 = vunpack.c.l.b16 %v964
    %v1001 = vunpack.c.l.b16 %v965
    %v1002 = vunpack.c.l.b16 %v966
    %v1003 = vunpack.c.l.b16 %v967
    %v1004 = vunpack.c.l.b16 %v968
    %v1005 = vunpack.c.l.b16 %v969
    %v1006 = vunpack.c.l.b16 %v970
    %v1007 = vunpack.c.l.b16 %v971
    %v1008 = vunpack.c.l.b16 %v972
    %v1009 = vunpack.c.l.b16 %v973
    %v1010 = vunpack.c.l.b16 %v974
    %v1011 = vpack.c.b16 %v996, %v995
    %v1012 = vpack.c.b16 %v998, %v997
    %v1013 = vpack.c.b16 %v1000, %v999
    %v1014 = vpack.c.b16 %v1002, %v1001
    %v1015 = vpack.c.b16 %v1004, %v1003
    %v1016 = vpack.c.b16 %v1006, %v1005
    %v1017 = vpack.c.b16 %v1008, %v1007
    %v1018 = vpack.c.b16 %v1010, %v1009
    %1027 = vmatpush.bf16.msra.mxu0 %v1018
    %1028 = vmatpush.bf16.msra.mxu0 %v1017
    %1029 = vmatpush.bf16.msra.mxu0 %v1016
    %1030 = vmatpush.bf16.msra.mxu0 %v1015
    %1031 = vmatpush.bf16.msra.mxu0 %v1014
    %1032 = vmatpush.bf16.msra.mxu0 %v1013
    %1033 = vmatpush.bf16.msra.mxu0 %v1012
    %1034 = vmatpush.bf16.msra.mxu0 %v1011
    %1035 = vmatmul.bf16.gmra.mxu0 %v958
    %v1036 = vpop.f32.mrf.mxu0
    %v1037 = vadd.f32 %v977, %v1036
    %v1038 = vpop.f32.mrf.mxu0
    %1039 = vdwg.mxu0
    %v1040 = vmax.f32 %v1037, 0.0
    %v1041 = vpack.c.bf16 %v1040, %v1040
    %v1042 = vld [vmem:[#allocation12] sm:$0xf]
    %v1043 = vld [vmem:[#allocation12 + $0x4] sm:$0xf]
    %v1044 = vld [vmem:[#allocation12 + $0x8] sm:$0xf]
    %v1045 = vld [vmem:[#allocation12 + $0xc] sm:$0xf]
    %v1046 = vld [vmem:[#allocation12 + $0x10] sm:$0xf]
    %v1047 = vld [vmem:[#allocation12 + $0x14] sm:$0xf]
    %v1048 = vld [vmem:[#allocation12 + $0x18] sm:$0xf]
    %v1049 = vld [vmem:[#allocation12 + $0x1c] sm:$0xf]
    %v1050 = vld [vmem:[#allocation12 + $0x20] sm:$0xf]
    %v1051 = vld [vmem:[#allocation12 + $0x24] sm:$0xf]
    %v1052 = vld [vmem:[#allocation12 + $0x28] sm:$0xf]
    %v1053 = vld [vmem:[#allocation12 + $0x2c] sm:$0xf]
    %v1054 = vld [vmem:[#allocation12 + $0x30] sm:$0xf]
    %v1055 = vld [vmem:[#allocation12 + $0x34] sm:$0xf]
    %v1056 = vld [vmem:[#allocation12 + $0x38] sm:$0xf]
    %v1057 = vld [vmem:[#allocation12 + $0x3c] sm:$0xf]
    %v1058 = vld [vmem:[%s8] sm:$0x1]
    %v1060 = vperm.slane %v1058, 0
    %v1078 = vunpack.c.l.b16 %v1042
    %v1079 = vunpack.c.l.b16 %v1043
    %v1080 = vunpack.c.l.b16 %v1044
    %v1081 = vunpack.c.l.b16 %v1045
    %v1082 = vunpack.c.l.b16 %v1046
    %v1083 = vunpack.c.l.b16 %v1047
    %v1084 = vunpack.c.l.b16 %v1048
    %v1085 = vunpack.c.l.b16 %v1049
    %v1086 = vunpack.c.l.b16 %v1050
    %v1087 = vunpack.c.l.b16 %v1051
    %v1088 = vunpack.c.l.b16 %v1052
    %v1089 = vunpack.c.l.b16 %v1053
    %v1090 = vunpack.c.l.b16 %v1054
    %v1091 = vunpack.c.l.b16 %v1055
    %v1092 = vunpack.c.l.b16 %v1056
    %v1093 = vunpack.c.l.b16 %v1057
    %v1094 = vpack.c.b16 %v1079, %v1078
    %v1095 = vpack.c.b16 %v1081, %v1080
    %v1096 = vpack.c.b16 %v1083, %v1082
    %v1097 = vpack.c.b16 %v1085, %v1084
    %v1098 = vpack.c.b16 %v1087, %v1086
    %v1099 = vpack.c.b16 %v1089, %v1088
    %v1100 = vpack.c.b16 %v1091, %v1090
    %v1101 = vpack.c.b16 %v1093, %v1092
    %1110 = vmatpush.bf16.msra.mxu0 %v1101
    %1111 = vmatpush.bf16.msra.mxu0 %v1100
    %1112 = vmatpush.bf16.msra.mxu0 %v1099
    %1113 = vmatpush.bf16.msra.mxu0 %v1098
    %1114 = vmatpush.bf16.msra.mxu0 %v1097
    %1115 = vmatpush.bf16.msra.mxu0 %v1096
    %1116 = vmatpush.bf16.msra.mxu0 %v1095
    %1117 = vmatpush.bf16.msra.mxu0 %v1094
    %1118 = vmatmul.bf16.gmra.mxu0 %v1041
    %v1119 = vpop.f32.mrf.mxu0
    %v1120 = vadd.f32 %v1060, %v1119
    %v1121 = vpop.f32.mrf.mxu0
    %1122 = vdwg.mxu0
    %v1123 = vmax.f32 %v1120, 0.0
    %v1124 = vpack.c.bf16 %v1123, %v1123
    %v1125 = vld [vmem:[#allocation14] sm:$0xf]
    %v1126 = vld [vmem:[#allocation14 + $0x4] sm:$0xf]
    %v1127 = vld [vmem:[#allocation14 + $0x8] sm:$0xf]
    %v1128 = vld [vmem:[#allocation14 + $0xc] sm:$0xf]
    %v1129 = vld [vmem:[#allocation14 + $0x10] sm:$0xf]
    %v1130 = vld [vmem:[#allocation14 + $0x14] sm:$0xf]
    %v1131 = vld [vmem:[#allocation14 + $0x18] sm:$0xf]
    %v1132 = vld [vmem:[#allocation14 + $0x1c] sm:$0xf]
    %v1133 = vld [vmem:[#allocation14 + $0x20] sm:$0xf]
    %v1134 = vld [vmem:[#allocation14 + $0x24] sm:$0xf]
    %v1135 = vld [vmem:[#allocation14 + $0x28] sm:$0xf]
    %v1136 = vld [vmem:[#allocation14 + $0x2c] sm:$0xf]
    %v1137 = vld [vmem:[#allocation14 + $0x30] sm:$0xf]
    %v1138 = vld [vmem:[#allocation14 + $0x34] sm:$0xf]
    %v1139 = vld [vmem:[#allocation14 + $0x38] sm:$0xf]
    %v1140 = vld [vmem:[#allocation14 + $0x3c] sm:$0xf]
    %v1141 = vld [vmem:[%s10] sm:$0x1]
    %v1143 = vperm.slane %v1141, 0
    %v1161 = vunpack.c.l.b16 %v1125
    %v1162 = vunpack.c.l.b16 %v1126
    %v1163 = vunpack.c.l.b16 %v1127
    %v1164 = vunpack.c.l.b16 %v1128
    %v1165 = vunpack.c.l.b16 %v1129
    %v1166 = vunpack.c.l.b16 %v1130
    %v1167 = vunpack.c.l.b16 %v1131
    %v1168 = vunpack.c.l.b16 %v1132
    %v1169 = vunpack.c.l.b16 %v1133
    %v1170 = vunpack.c.l.b16 %v1134
    %v1171 = vunpack.c.l.b16 %v1135
    %v1172 = vunpack.c.l.b16 %v1136
    %v1173 = vunpack.c.l.b16 %v1137
    %v1174 = vunpack.c.l.b16 %v1138
    %v1175 = vunpack.c.l.b16 %v1139
    %v1176 = vunpack.c.l.b16 %v1140
    %v1177 = vpack.c.b16 %v1162, %v1161
    %v1178 = vpack.c.b16 %v1164, %v1163
    %v1179 = vpack.c.b16 %v1166, %v1165
    %v1180 = vpack.c.b16 %v1168, %v1167
    %v1181 = vpack.c.b16 %v1170, %v1169
    %v1182 = vpack.c.b16 %v1172, %v1171
    %v1183 = vpack.c.b16 %v1174, %v1173
    %v1184 = vpack.c.b16 %v1176, %v1175
    %1193 = vmatpush.bf16.msra.mxu0 %v1184
    %1194 = vmatpush.bf16.msra.mxu0 %v1183
    %1195 = vmatpush.bf16.msra.mxu0 %v1182
    %1196 = vmatpush.bf16.msra.mxu0 %v1181
    %1197 = vmatpush.bf16.msra.mxu0 %v1180
    %1198 = vmatpush.bf16.msra.mxu0 %v1179
    %1199 = vmatpush.bf16.msra.mxu0 %v1178
    %1200 = vmatpush.bf16.msra.mxu0 %v1177
    %1201 = vmatmul.bf16.gmra.mxu0 %v1124
    %v1202 = vpop.f32.mrf.mxu0
    %v1203 = vadd.f32 %v1143, %v1202
    %v1204 = vpop.f32.mrf.mxu0
    %1205 = vdwg.mxu0
    %v1206 = vlaneseq
    %v1207 = vand.u32 %v1206, 127
    %vm1208 = vcmp.lt.s32.totalorder %v1207, 3
    %vm1209 = vcmp.eq.s32.totalorder %v1207, 3
    %v1210 = vsel %vm1208, %v1203, -1e+30
    %1211 = vmax.xlane.f32.xlu0 %v1210
    %v1212 = vpop.xlane.xlu0 %1211
    %v1213 = vsub.f32 %v1203, %v1212
    %v1214 = vsub.f32 0.0, %v1203
    %v1215 = vsel %vm1209, %v1214, -1e+30
    %v1216 = vsel %vm1208, %v1213, %v1215
    %v1217 = vmul.f32 %v1216, 1.442695
    %v1218 = vpow.pop %v1217
    %v1219 = vsel %vm1208, %v1218, 0.0
    %1220 = vadd.xlane.f32.xlu0 %v1219
    %v1221 = vpop.xlane.xlu0 %1220
    %v1222 = vrcp.pop %v1221
    %v1223 = vmul.f32 %v1221, %v1222
    %v1224 = vsub.f32 1.0, %v1223
    %v1225 = vmul.f32 %v1222, %v1224
    %v1226 = vadd.f32 %v1222, %v1225
    %vm1227 = vweird.f32 %v1221
    %vm1228 = vweird.f32 %v1222
    %vm1229 = vmor %vm1227, %vm1228
    %v1230 = vsel %vm1229, %v1222, %v1226
    %v1231 = vand.u32 2147483647, %v1221
    %vm1232 = vcmp.eq.f32.partialorder %v1231, 8.507059e+37
    %v1233 = vand.u32 %v1221, 2147483648
    %v1234 = vor.u32 1.1754944e-38, %v1233
    %v1235 = vsel %vm1232, %v1234, %v1230
    %v1236 = vmul.f32 1.0, %v1235
    %v1237 = vmul.f32 %v1218, %v1236
    %v1238 = vsel %vm1209, %v1218, 0.0
    %1239 = vadd.xlane.f32.xlu0 %v1238
    %v1240 = vpop.xlane.xlu0 %1239
    %v1241 = vadd.f32 %v1240, 1.0
    %v1242 = vrcp.pop %v1241
    %v1243 = vsel %vm1209, %v1242, %v1203
    %v1244 = vsel %vm1208, %v1237, %v1243
    %v1245 = vpack.c.bf16 %v1244, %v1244
    %1246 = vst [vmem:[#allocation15] sm:$0xf] %v1245
    // Predicated region
    $region74: #{tpu_custom_call.1} parent=1 // pred_check
      _
    $region75: #{tpu_custom_call.1} parent=1 // pred_check_branch
      %1248 = sbr.rel (0) target = $region77
    $region76: #{tpu_custom_call.1} parent=1 // pred_region
      %1250 = vsyncadd [#allocation5], 0
      %s1252 = sshll.u32 [#allocation15], 4
      %s1253 = int_to_ptr.vmem [resolvable:$true] %s1252
      %s1254 = sshll.u32 %s11, 4
      %s1255 = int_to_ptr.hbm [resolvable:$true] %s1254
      %1257 = dma.vmem_to_hbm [thread:$0]  %s1253, 64, %s1255, [#allocation5]
    $region77: #{tpu_custom_call.1} parent=1 // pred_fallthru
      _
    // Predicated region
    $region78: #{tpu_custom_call.1} parent=1 // pred_check
      _
    $region79: #{tpu_custom_call.1} parent=1 // pred_check_branch
      %1259 = sbr.rel (0) target = $region81
    $region80: #{tpu_custom_call.1} parent=1 // pred_region
      %1261 = dma.done [#allocation5], 64
    $region81: #{tpu_custom_call.1} parent=1 // pred_fallthru
      _
    %1262 = vsyncpa [#allocation4], 1
    %1263 = vsyncpa [#allocation7], 1
    %1264 = vsyncpa [#allocation10], 1
    %1265 = vsyncpa [#allocation13], 1
    %1266 = vsyncpa [#allocation5], 1

</llo_original>
